<compile_context>
chip_gen: v7x
topology: tpu7x:2x2x1
jax: 0.10.0
libtpu: 0.0.40
codegen_flags: <defaults>
</compile_context>

<pallas_src>
import functools

import jax
import jax.numpy as jnp
from jax.experimental import pallas as pl
from jax.experimental.pallas import tpu as pltpu


def _round_down(x: int, k: int) -> int:
    return (x // k) * k


def _vmem_capacity_bytes() -> int:
    """Generation-aware VMEM capacity; conservative fallback = v7x per-TC."""
    try:
        return int(pltpu.get_tpu_info().vmem_capacity_bytes)
    except Exception:
        return 64 * 1024 * 1024


def _choose_tiles(b: int, n: int, m: int, dtype, vmem_bytes: int):
    itemsize = jnp.dtype(dtype).itemsize
    acc_itemsize = max(itemsize, 4)          # budget in accumulator (f32) bytes
    # Rows per packed sublane group: 8 (f32), 16 (bf16/f16), 32 (int8/fp8).
    pack = 8 * max(1, 4 // itemsize)

    # One input block's budget, counted in f32 bytes so the bf16/int8 upcast
    # temporary is covered.  Double-buffered input + f32 temp + out + acc stay
    # well inside the 0.6*vmem limit declared below.
    block_budget = vmem_bytes // 6

    # Batch tile: full b when small, else 8 (output block's second-minor dim
    # must be a multiple of 8 or equal to the full dim).
    tb = b if b <= 8 else 8

    # Lane axis: prefer full m (contiguous DMA + single lane-dense store).
    # Only fall back to a multiple-of-128 cap when even one pack-row slab
    # (tb, pack, m) would not fit the budget.
    if tb * pack * m * acc_itemsize <= block_budget:
        tm = m
    else:
        tm = max(128, _round_down(block_budget // (tb * pack * acc_itemsize), 128))

    # Guarantee >= 2 tiles along a "parallel" axis so both v7x TensorCores are
    # used; split m into two 128-aligned halves when the (b, m) grid is (1, 1).
    if tb == b and tm == m and m >= 256:
        tm = ((m + 255) // 256) * 128

    # Reduction tile: as large as the budget allows, pack-aligned.
    tn_budget = max(pack, block_budget // (tb * tm * acc_itemsize))
    tn = n if n <= tn_budget else max(pack, _round_down(tn_budget, pack))
    return tb, tn, tm


def _sum_dim1_kernel(x_ref, o_ref, acc_ref, *, n_rem: int):
    k = pl.program_id(2)
    last = pl.num_programs(2) - 1

    @pl.when(k == 0)
    def _init():
        acc_ref[...] = jnp.zeros_like(acc_ref)

    def _accumulate(rows: int):
        acc_ref[...] += jnp.sum(x_ref[:, :rows, :].astype(acc_ref.dtype), axis=1)

    if n_rem == 0:
        _accumulate(x_ref.shape[1])
    else:
        # Ragged reduction tail: mask via a *static* sub-slice, and only on the
        # last step (no per-step iota / compare / select).
        @pl.when(k != last)
        def _full():
            _accumulate(x_ref.shape[1])

        @pl.when(k == last)
        def _tail():
            _accumulate(n_rem)

    @pl.when(k == last)
    def _finalize():
        o_ref[...] = acc_ref[...].astype(o_ref.dtype)


def two_dimensional_random_projection(
    x: jax.Array, *, tb: int | None = None, tn: int | None = None, tm: int | None = None
) -> jax.Array:
    """Pallas equivalent of `x.sum(dim=1)` for a (b, n, m) input."""
    b, n, m = x.shape
    itemsize = jnp.dtype(x.dtype).itemsize
    vmem_bytes = _vmem_capacity_bytes()

    atb, atn, atm = _choose_tiles(b, n, m, x.dtype, vmem_bytes)
    tb = atb if tb is None else tb
    tn = atn if tn is None else tn
    tm = atm if tm is None else tm

    acc_dtype = jnp.float32 if jnp.issubdtype(x.dtype, jnp.floating) else jnp.int32
    grid = (pl.cdiv(b, tb), pl.cdiv(m, tm), pl.cdiv(n, tn))
    n_rem = n % tn

    kernel = functools.partial(_sum_dim1_kernel, n_rem=n_rem)
    return pl.pallas_call(
        kernel,
        out_shape=jax.ShapeDtypeStruct((b, m), x.dtype),
        grid_spec=pltpu.PrefetchScalarGridSpec(
            num_scalar_prefetch=0,
            grid=grid,
            in_specs=[
                # x block: (tb, tn, tm); the n tile index is the last grid axis.
                # Default double buffering is right for the large auto-chosen
                # tiles; tiny forced tiles (test-only) would want Buffered(3).
                pl.BlockSpec((tb, tn, tm), lambda bi, mi, ki: (bi, ki, mi)),
            ],
            # Output block constant across the reduction axis (written once at
            # the final step from the f32 scratch accumulator).
            out_specs=pl.BlockSpec((tb, tm), lambda bi, mi, ki: (bi, mi)),
            scratch_shapes=[pltpu.VMEM((tb, tm), acc_dtype)],
        ),
        compiler_params=pltpu.CompilerParams(
            dimension_semantics=("parallel", "parallel", "arbitrary"),
            vmem_limit_bytes=int(0.6 * vmem_bytes),
        ),
        cost_estimate=pl.CostEstimate(
            flops=b * n * m,
            transcendentals=0,
            bytes_accessed=b * n * m * itemsize + b * m * itemsize,
        ),
    )(x)


if __name__ == "__main__":
    root = jax.random.PRNGKey(0)
    k1, k2, k3 = jax.random.split(root, 3)

    # Case 1: small aligned shapes; auto tiling -> a single block.
    b, n, m = 4, 16, 128
    x = jax.random.normal(k1, (b, n, m), dtype=jnp.float32)
    out = jax.block_until_ready(two_dimensional_random_projection(x))
    ref = jnp.sum(x, axis=1)
    assert out.shape == (b, m), out.shape
    assert out.dtype == x.dtype, out.dtype
    assert jnp.allclose(out, ref, atol=1e-5, rtol=1e-5), "case 1 mismatch"

    # Case 2: unaligned b/n/m with forced small tiles to exercise multi-step
    # accumulation, the static-slice tail n-tile, and ragged boundary m blocks.
    b2, n2, m2 = 5, 20, 200
    x2 = jax.random.normal(k2, (b2, n2, m2), dtype=jnp.float32)
    out2 = jax.block_until_ready(
        two_dimensional_random_projection(x2, tn=8, tm=128))
    ref2 = jnp.sum(x2, axis=1)
    assert out2.shape == (b2, m2), out2.shape
    assert jnp.allclose(out2, ref2, atol=1e-5, rtol=1e-5), "case 2 mismatch"

    # Case 3: bf16 input — f32 scratch accumulation, single cast at the end;
    # also exercises the m-split that guarantees >= 2 parallel tiles.
    x3 = jax.random.normal(k3, (2, 64, 256), dtype=jnp.bfloat16)
    out3 = jax.block_until_ready(two_dimensional_random_projection(x3))
    ref3 = jnp.sum(x3.astype(jnp.float32), axis=1)
    assert out3.shape == (2, 256) and out3.dtype == jnp.bfloat16
    assert jnp.allclose(out3.astype(jnp.float32), ref3, atol=2e-1, rtol=2e-2), \
        "case 3 mismatch"

    print("KERNEL_OK")
</pallas_src>

<mosaic_0001>
module attributes {stable_mosaic.version = 11 : i64} {
  func.func @_sum_dim1_kernel(%arg0: i32, %arg1: i32, %arg2: i32, %arg3: memref<4x16x128xf32, #tpu.memory_space<vmem>>, %arg4: memref<4x128xf32, #tpu.memory_space<vmem>>, %arg5: memref<4x128xf32, #tpu.memory_space<vmem>>) attributes {dimension_semantics = [#tpu.dimension_semantics<parallel>, #tpu.dimension_semantics<parallel>, #tpu.dimension_semantics<arbitrary>], iteration_bounds = array<i64: 1, 1, 1>, scalar_prefetch = 0 : i64, scratch_operands = 1 : i64, tpu.core_type = #tpu.core_type<tc>, window_params = [{transform_indices = @transform_0, window_bounds = array<i64: 4, 16, 128>}, {transform_indices = @transform_1, window_bounds = array<i64: 4, 128>}]} {
    %c0_i32 = arith.constant 0 : i32
    %0 = arith.cmpi eq, %arg2, %c0_i32 : i32
    %1 = arith.extui %0 : i1 to i32
    %c0_i32_0 = arith.constant 0 : i32
    %2 = arith.cmpi ne, %1, %c0_i32_0 : i32
    scf.if %2 {
      %cst_9 = arith.constant 0.000000e+00 : f32
      %11 = vector.broadcast %cst_9 : f32 to vector<4x128xf32>
      %c0_10 = arith.constant 0 : index
      %c0_11 = arith.constant 0 : index
      %12 = vector.load %arg5[%c0_10, %c0_11] : memref<4x128xf32, #tpu.memory_space<vmem>>, vector<4x128xf32>
      tpu.vector_store %arg5[%c0_10, %c0_11], %11 {strides = array<i32>} : memref<4x128xf32, #tpu.memory_space<vmem>>, vector<4x128xf32>,
    } else {
    }
    %c0 = arith.constant 0 : index
    %c0_1 = arith.constant 0 : index
    %3 = vector.load %arg5[%c0, %c0_1] : memref<4x128xf32, #tpu.memory_space<vmem>>, vector<4x128xf32>
    %c0_2 = arith.constant 0 : index
    %c0_3 = arith.constant 0 : index
    %c0_4 = arith.constant 0 : index
    %4 = vector.load %arg3[%c0_2, %c0_3, %c0_4] : memref<4x16x128xf32, #tpu.memory_space<vmem>>, vector<4x16x128xf32>
    %cst = arith.constant dense<0.000000e+00> : vector<4x128xf32>
    %5 = vector.multi_reduction <add>, %4, %cst [1] : vector<4x16x128xf32> to vector<4x128xf32>
    %6 = arith.addf %3, %5 : vector<4x128xf32>
    %c0_5 = arith.constant 0 : index
    %c0_6 = arith.constant 0 : index
    %7 = vector.load %arg5[%c0_5, %c0_6] : memref<4x128xf32, #tpu.memory_space<vmem>>, vector<4x128xf32>
    tpu.vector_store %arg5[%c0_5, %c0_6], %6 {strides = array<i32>} : memref<4x128xf32, #tpu.memory_space<vmem>>, vector<4x128xf32>,
    %c0_i32_7 = arith.constant 0 : i32
    %8 = arith.cmpi eq, %arg2, %c0_i32_7 : i32
    %9 = arith.extui %8 : i1 to i32
    %c0_i32_8 = arith.constant 0 : i32
    %10 = arith.cmpi ne, %9, %c0_i32_8 : i32
    scf.if %10 {
      %c0_9 = arith.constant 0 : index
      %c0_10 = arith.constant 0 : index
      %11 = vector.load %arg5[%c0_9, %c0_10] : memref<4x128xf32, #tpu.memory_space<vmem>>, vector<4x128xf32>
      %c0_11 = arith.constant 0 : index
      %c0_12 = arith.constant 0 : index
      %12 = vector.load %arg4[%c0_11, %c0_12] : memref<4x128xf32, #tpu.memory_space<vmem>>, vector<4x128xf32>
      tpu.vector_store %arg4[%c0_11, %c0_12], %11 {strides = array<i32>} : memref<4x128xf32, #tpu.memory_space<vmem>>, vector<4x128xf32>,
    } else {
    }
    return
  }
  func.func @transform_0(%arg0: i32, %arg1: i32, %arg2: i32) -> (i32, i32, i32) {
    %c0_i32 = arith.constant 0 : i32
    return %arg0, %arg2, %arg1 : i32, i32, i32
  }
  func.func @transform_1(%arg0: i32, %arg1: i32, %arg2: i32) -> (i32, i32) {
    %c0_i32 = arith.constant 0 : i32
    return %arg0, %arg1 : i32, i32
  }
}

</mosaic_0001>

<llo_original>
// kernel: tpu_custom_call.1
$region0: #{tpu_custom_call.1}
  #allocation0 [shape = 'u32[]', space=smem, size = 0x4, offset = 0x4, fixed_abs, tag = 'smem constant byte address 0x4 - core index']
  #allocation1 [shape = 'u32[144,128]{1,0:T(1,128)}', space=vmem, size = 0x12000, scoped, tag = 'internal scratch']
  #allocation2 [shape = 'f32[4,128]{1,0:T(4,128)}', space=vmem, size = 0x800, scoped, tag = 'scratch operand']
  %s0 = inlined_call_operand.hbm [shape: f32[4,16,128], index: 0, kind: input, shape index: {}]
  %s1 = inlined_call_operand.hbm [shape: f32[4,128], index: 1, kind: output, shape index: {}]
  %s2 = sld [smem:[#allocation0]]
  $region26: #{tpu_custom_call.1} parent=0
    _
  %s4 = ssub.s32 1, %s2
  %s5 = scalar_select 0, %s4, %s2
  $region1: #{tpu_custom_call.1} parent=0
    #allocation3 [shape = 'u8[32768]{0}', space=vmem, size = 0x8000, scoped, tag = 'input window, operand 0, single buffered']
    #allocation4 [shape = 's32[1]{0}', space=sflag, size = 0x4, scoped, tag = 'scoped memory for tpu_custom_call.1']
    #allocation5 [shape = 's32[1]{0}', space=sflag, size = 0x4, scoped, tag = 'scoped memory for tpu_custom_call.1']
    #allocation6 [shape = 'u8[2048]{0}', space=vmem, size = 0x800, scoped, tag = 'output window, operand 0, single buffered']
    %6 = vsyncpa [#allocation4], 0
    %7 = vsyncpa [#allocation5], 0
    // Predicated region
    $region2: #{tpu_custom_call.1} parent=1 // pred_check
      _
    $region3: #{tpu_custom_call.1} parent=1 // pred_check_branch
      %9 = sbr.rel (0) target = $region5
    $region4: #{tpu_custom_call.1} parent=1 // pred_region
      %s11 = ssub.s32 1024, 1024
      %12 = vsyncadd [#allocation4], %s11
      %s13 = sshll.u32 [#allocation3], 4
      %s14 = int_to_ptr.vmem [resolvable:$true] %s13
      %19 = dma.hbm_to_vmem [thread:$0]  %s0, 1024, %s14, [#allocation4], 128, 128, 8
    $region5: #{tpu_custom_call.1} parent=1 // pred_fallthru
      _
    // Predicated region
    $region6: #{tpu_custom_call.1} parent=1 // pred_check
      _
    $region7: #{tpu_custom_call.1} parent=1 // pred_check_branch
      %21 = sbr.rel (0) target = $region9
    $region8: #{tpu_custom_call.1} parent=1 // pred_region
      %22 = dma.done [#allocation4], 1024
    $region9: #{tpu_custom_call.1} parent=1 // pred_fallthru
      _
    %p23 = scmp.eq.s32.totalorder 0, 0
    // Predicated region
    $region10: #{tpu_custom_call.1} parent=1 // pred_check
      %p24 = pneg %p23
    $region11: #{tpu_custom_call.1} parent=1 // pred_check_branch
      %26 = sbr.rel (%p24) target = $region13
    $region12: #{tpu_custom_call.1} parent=1 // pred_region
      %27 = vst [vmem:[#allocation2] sm:$0xf] 0.0
    $region13: #{tpu_custom_call.1} parent=1 // pred_fallthru
      _
    %v28 = vld [vmem:[#allocation2] sm:$0xf]
    %v29 = vld [vmem:[#allocation3] sm:$0xff]
    %v30 = vld [vmem:[#allocation3 + $0x8] sm:$0xff]
    %v31 = vld [vmem:[#allocation3 + $0x10] sm:$0xff]
    %v32 = vld [vmem:[#allocation3 + $0x18] sm:$0xff]
    %v33 = vld [vmem:[#allocation3 + $0x20] sm:$0xff]
    %v34 = vld [vmem:[#allocation3 + $0x28] sm:$0xff]
    %v35 = vld [vmem:[#allocation3 + $0x30] sm:$0xff]
    %v36 = vld [vmem:[#allocation3 + $0x38] sm:$0xff]
    %v37 = vadd.f32 %v29, %v30
    %v38 = vrot.slane %v37, 4
    %v39 = vadd.f32 %v37, %v38
    %v40 = vrot.slane %v39, 2
    %v41 = vadd.f32 %v39, %v40
    %v42 = vrot.slane %v41, 1
    %v43 = vadd.f32 %v41, %v42
    %v44 = vadd.f32 %v31, %v32
    %v45 = vrot.slane %v44, 4
    %v46 = vadd.f32 %v44, %v45
    %v47 = vrot.slane %v46, 2
    %v48 = vadd.f32 %v46, %v47
    %v49 = vrot.slane %v48, 1
    %v50 = vadd.f32 %v48, %v49
    %v51 = vadd.f32 %v33, %v34
    %v52 = vrot.slane %v51, 4
    %v53 = vadd.f32 %v51, %v52
    %v54 = vrot.slane %v53, 2
    %v55 = vadd.f32 %v53, %v54
    %v56 = vrot.slane %v55, 1
    %v57 = vadd.f32 %v55, %v56
    %v58 = vadd.f32 %v35, %v36
    %v59 = vrot.slane %v58, 4
    %v60 = vadd.f32 %v58, %v59
    %v61 = vrot.slane %v60, 2
    %v62 = vadd.f32 %v60, %v61
    %v63 = vrot.slane %v62, 1
    %v64 = vadd.f32 %v62, %v63
    %vm69 = vcmask 1041409
    %v70 = vsel %vm69, %v50, %v43
    %vm71 = vcmask 1042434
    %v72 = vsel %vm71, %v57, %v70
    %vm73 = vcmask 1043459
    %v74 = vsel %vm73, %v64, %v72
    %v76 = vadd.f32 %v28, %v74
    %77 = vst [vmem:[#allocation2] sm:$0xf] %v76
    // Predicated region
    $region14: #{tpu_custom_call.1} parent=1 // pred_check
      %p78 = pneg %p23
    $region15: #{tpu_custom_call.1} parent=1 // pred_check_branch
      %80 = sbr.rel (%p78) target = $region17
    $region16: #{tpu_custom_call.1} parent=1 // pred_region
      %v81 = vld [vmem:[#allocation2] sm:$0xf]
      %82 = vst [vmem:[#allocation6] sm:$0xf] %v81
    $region17: #{tpu_custom_call.1} parent=1 // pred_fallthru
      _
    // Predicated region
    $region18: #{tpu_custom_call.1} parent=1 // pred_check
      _
    $region19: #{tpu_custom_call.1} parent=1 // pred_check_branch
      %84 = sbr.rel (0) target = $region21
    $region20: #{tpu_custom_call.1} parent=1 // pred_region
      %s86 = ssub.s32 64, 64
      %87 = vsyncadd [#allocation5], %s86
      %s89 = sshll.u32 [#allocation6], 4
      %s90 = int_to_ptr.vmem [resolvable:$true] %s89
      %92 = dma.vmem_to_hbm [thread:$0]  %s90, 64, %s1, [#allocation5]
    $region21: #{tpu_custom_call.1} parent=1 // pred_fallthru
      _
    // Predicated region
    $region22: #{tpu_custom_call.1} parent=1 // pred_check
      _
    $region23: #{tpu_custom_call.1} parent=1 // pred_check_branch
      %94 = sbr.rel (0) target = $region25
    $region24: #{tpu_custom_call.1} parent=1 // pred_region
      %95 = dma.done [#allocation5], 64
    $region25: #{tpu_custom_call.1} parent=1 // pred_fallthru
      _
    %96 = vsyncpa [#allocation4], 1
    %97 = vsyncpa [#allocation5], 1

</llo_original>
